<compile_context>
chip_gen: v5e
topology: v5e:2x2
jax: 0.10.0
libtpu: 0.0.40
codegen_flags: <defaults>
</compile_context>

<pallas_src>
import math
import functools

import jax
import jax.numpy as jnp
from jax import lax
from jax.experimental import pallas as pl
from jax.experimental.pallas import tpu as pltpu


def _gelu_exact(x):
    # PyTorch F.gelu default is the exact (erf) formulation.
    return 0.5 * x * (1.0 + lax.erf(x * (1.0 / math.sqrt(2.0))))


def _round_up(x, m):
    return ((x + m - 1) // m) * m


def _vmem_limit_bytes():
    # Generation-aware scoped-VMEM limit (v5e/v6e: 128 MiB phys, v7x: 64 MiB).
    try:
        cap = int(pltpu.get_tpu_info().vmem_capacity_bytes)
    except Exception:
        cap = 64 * 1024 * 1024
    return min((cap * 3) // 4, 100 * 1024 * 1024)


_VMEM_LIMIT_BYTES = _vmem_limit_bytes()


# --------------------------------------------------------------------------
# Kernels
# --------------------------------------------------------------------------
def _matmul_bias_kernel_wres(x_ref, w_ref, b_ref, o_ref):
    # x_ref: (tm, Kp), w_ref: (Kp, tn) resident across the M axis,
    # b_ref: (1, tn) f32, o_ref: (tm, tn).
    acc = jnp.dot(x_ref[...], w_ref[...], preferred_element_type=jnp.float32)
    o_ref[...] = (acc + b_ref[...]).astype(o_ref.dtype)


def _matmul_bias_kernel_acc(x_ref, w_ref, b_ref, o_ref, acc_ref):
    # x_ref: (tm, tk), w_ref: (tk, tn), b_ref: (1, tn) f32,
    # o_ref: (tm, tn), acc_ref: (tm, tn) f32 scratch resident across K.
    k = pl.program_id(2)

    @pl.when(k == 0)
    def _():
        acc_ref[...] = jnp.zeros_like(acc_ref)

    acc_ref[...] += jnp.dot(x_ref[...], w_ref[...],
                            preferred_element_type=jnp.float32)

    @pl.when(k == pl.num_programs(2) - 1)
    def _():
        o_ref[...] = (acc_ref[...] + b_ref[...]).astype(o_ref.dtype)


# --------------------------------------------------------------------------
# One-time parameter preprocessing (hoisted out of the forward hot path)
# --------------------------------------------------------------------------
def ulinear_prepare(weight, expansion_data, mid_weight, mid_bias,
                    bias_weight, bias_bias, *, block_n=1024, block_k=512,
                    compute_dtype=None):
    """Returns (w_t, bias):
       w_t  : (Kp, Np) pre-transposed / padded / (optionally) cast weight.
       bias : (out_features,) f32 bias vector from the tiny parameter-only MLP.
    Call once; pass the results (and the same block_n/block_k) to
    ulinear_forward for every call."""
    assert block_n % 128 == 0 and block_k % 128 == 0
    N, K = weight.shape
    f32 = jnp.float32

    # Bias path: depends only on parameters, never on the input.
    mid = mid_weight.astype(f32) @ expansion_data.astype(f32) + mid_bias.astype(f32)
    bias = bias_weight.astype(f32) @ _gelu_exact(mid) + bias_bias.astype(f32)

    Kp0 = _round_up(K, 128)
    tk = min(block_k, Kp0)
    Kp = _round_up(Kp0, tk)
    Np0 = _round_up(N, 128)
    tn = min(block_n, Np0)
    Np = _round_up(Np0, tn)

    w_t = weight.T                                      # (K, N) native RHS layout
    if (Kp, Np) != (K, N):
        w_t = jnp.pad(w_t, ((0, Kp - K), (0, Np - N)))
    if compute_dtype is not None:
        w_t = w_t.astype(compute_dtype)                 # bf16 recommended for MXU
    return w_t, bias


# --------------------------------------------------------------------------
# Forward
# --------------------------------------------------------------------------
@functools.partial(
    jax.jit,
    static_argnames=("block_m", "block_n", "block_k", "force_reduction_grid"))
def ulinear_forward(x, w_t, bias, *, block_m=512, block_n=1024, block_k=512,
                    force_reduction_grid=False):
    """x: (..., in_features) -> (..., out_features).
    w_t / bias must come from ulinear_prepare() called with the same
    block_n / block_k."""
    assert block_m % 8 == 0 and block_n % 128 == 0 and block_k % 128 == 0
    Kp, Np = w_t.shape
    N = bias.shape[0]
    K = x.shape[-1]
    lead = x.shape[:-1]
    M = 1
    for d in lead:
        M *= d
    x2d = x.reshape(M, K)

    # ---- tiles (same derivation as ulinear_prepare, so they divide Kp/Np) ----
    tn = min(block_n, Np)
    tk = min(block_k, Kp)
    assert Np % tn == 0 and Kp % tk == 0, "block_n/block_k must match ulinear_prepare"
    Mp0 = _round_up(max(M, 1), 8)
    tm = min(block_m, Mp0)
    Mp = _round_up(Mp0, tm)
    # v7x has 2 TensorCores: make sure there are >= 2 parallel tiles.
    if (Mp // tm) * (Np // tn) < 2 and Mp0 >= 16:
        tm = _round_up(Mp0 // 2, 8)
        Mp = _round_up(Mp0, tm)

    # ---- pad / cast the activation ----
    xp = x2d
    if (Mp, Kp) != (M, K):
        xp = jnp.pad(xp, ((0, Mp - M), (0, Kp - K)))
    if xp.dtype != w_t.dtype:
        xp = xp.astype(w_t.dtype)           # MXU compute dtype (bf16 recommended)

    bp = bias if Np == N else jnp.pad(bias, ((0, Np - N),))
    bp = bp.reshape(1, Np)

    in_item = jnp.dtype(w_t.dtype).itemsize
    out_item = jnp.dtype(x.dtype).itemsize
    mt, nt, kt = Mp // tm, Np // tn, Kp // tk

    # Weight-resident path: whole K per tile, N outermost; each (Kp, tn) weight
    # strip is DMA'd from HBM exactly once and stays resident over the M tiles.
    wres_vmem = (2 * tm * Kp * in_item + 2 * Kp * tn * in_item
                 + 2 * tm * tn * out_item + 2 * Np * 4)
    use_wres = (not force_reduction_grid) and wres_vmem <= (_VMEM_LIMIT_BYTES * 3) // 5

    if use_wres:
        cost = pl.CostEstimate(
            flops=2 * M * K * N, transcendentals=0,
            bytes_accessed=int(nt * Mp * Kp * in_item + Np * Kp * in_item
                               + Np * 4 + Mp * Np * out_item))
        out = pl.pallas_call(
            _matmul_bias_kernel_wres,
            out_shape=jax.ShapeDtypeStruct((Mp, Np), x.dtype),
            grid_spec=pltpu.PrefetchScalarGridSpec(
                num_scalar_prefetch=0,
                grid=(nt, mt),
                in_specs=[
                    pl.BlockSpec((tm, Kp), lambda j, i: (i, 0)),   # activation
                    pl.BlockSpec((Kp, tn), lambda j, i: (0, j)),   # weight (resident over i)
                    pl.BlockSpec((1, tn), lambda j, i: (0, j)),    # bias
                ],
                out_specs=pl.BlockSpec((tm, tn), lambda j, i: (i, j)),
            ),
            compiler_params=pltpu.CompilerParams(
                dimension_semantics=("parallel", "parallel"),
                vmem_limit_bytes=_VMEM_LIMIT_BYTES),
            cost_estimate=cost,
        )(xp, w_t, bp)
    else:
        cost = pl.CostEstimate(
            flops=2 * M * K * N, transcendentals=0,
            bytes_accessed=int(nt * Mp * Kp * in_item + mt * Np * Kp * in_item
                               + Np * 4 + Mp * Np * out_item))
        out = pl.pallas_call(
            _matmul_bias_kernel_acc,
            out_shape=jax.ShapeDtypeStruct((Mp, Np), x.dtype),
            grid_spec=pltpu.PrefetchScalarGridSpec(
                num_scalar_prefetch=0,
                grid=(mt, nt, kt),
                in_specs=[
                    pl.BlockSpec((tm, tk), lambda i, j, k: (i, k)),   # activation
                    pl.BlockSpec((tk, tn), lambda i, j, k: (k, j)),   # weight (K, N)
                    pl.BlockSpec((1, tn), lambda i, j, k: (0, j)),    # bias
                ],
                out_specs=pl.BlockSpec((tm, tn), lambda i, j, k: (i, j)),
                scratch_shapes=[pltpu.VMEM((tm, tn), jnp.float32)],
            ),
            compiler_params=pltpu.CompilerParams(
                dimension_semantics=("parallel", "parallel", "arbitrary"),
                vmem_limit_bytes=_VMEM_LIMIT_BYTES),
            cost_estimate=cost,
        )(xp, w_t, bp)

    out = out[:M, :N]
    return out.reshape(*lead, N)


# --------------------------------------------------------------------------
# Init + pure-JAX reference
# --------------------------------------------------------------------------
def _uniform(key, shape, bound, dtype=jnp.float32):
    return jax.random.uniform(key, shape, dtype=dtype, minval=-bound, maxval=bound)


def init_ulinear_params(key, in_features, out_features, mid_in, mid_out):
    """Mirrors the PyTorch module's reset_parameters / nn.Linear defaults."""
    ks = jax.random.split(key, 6)
    weight = _uniform(ks[0], (out_features, in_features), 1.0 / math.sqrt(in_features))
    expansion_data = _uniform(ks[1], (mid_in,), 1.0 / math.sqrt(in_features))
    mid_weight = _uniform(ks[2], (mid_out, mid_in), 1.0 / math.sqrt(mid_in))
    mid_bias = _uniform(ks[3], (mid_out,), 1.0 / math.sqrt(mid_in))
    bias_weight = _uniform(ks[4], (out_features, mid_out), 1.0 / math.sqrt(mid_out))
    bias_bias = _uniform(ks[5], (out_features,), 1.0 / math.sqrt(mid_out))
    return weight, expansion_data, mid_weight, mid_bias, bias_weight, bias_bias


def ulinear_reference(x, weight, expansion_data, mid_weight, mid_bias,
                      bias_weight, bias_bias):
    result = jnp.dot(x, weight.T, precision=lax.Precision.HIGHEST)
    bias = mid_weight @ expansion_data + mid_bias
    bias = bias_weight @ _gelu_exact(bias) + bias_bias
    return result + bias


if __name__ == "__main__":
    key = jax.random.PRNGKey(0)

    # Case 1: small shapes consistent with the module: batch=2, seq=8, hidden=32.
    batch, seq = 2, 8
    in_features, out_features = 32, 48
    mid_in, mid_out = 16, 24
    k_params, k_x, key = jax.random.split(key, 3)
    params = init_ulinear_params(k_params, in_features, out_features, mid_in, mid_out)
    x = jax.random.normal(k_x, (batch, seq, in_features), dtype=jnp.float32)

    w_t, bias_vec = ulinear_prepare(*params)
    out = jax.block_until_ready(ulinear_forward(x, w_t, bias_vec))
    ref = ulinear_reference(x, *params)
    assert out.shape == (batch, seq, out_features)
    assert jnp.allclose(out, ref, atol=1e-4, rtol=1e-4), "mismatch vs reference (case 1)"

    # Case 2: ragged shapes (not multiples of 8 / 128) -> padding path.
    batch2, seq2 = 3, 5
    in2, out2 = 40, 72
    k_params2, k_x2, key = jax.random.split(key, 3)
    params2 = init_ulinear_params(k_params2, in2, out2, mid_in, mid_out)
    x2 = jax.random.normal(k_x2, (batch2, seq2, in2), dtype=jnp.float32)

    w_t2, bias_vec2 = ulinear_prepare(*params2)
    out2_v = jax.block_until_ready(ulinear_forward(x2, w_t2, bias_vec2))
    ref2 = ulinear_reference(x2, *params2)
    assert out2_v.shape == (batch2, seq2, out2)
    assert jnp.allclose(out2_v, ref2, atol=1e-4, rtol=1e-4), "mismatch vs reference (case 2)"

    # Case 3: bf16 MXU compute + multi-step K reduction grid (acc-scratch kernel).
    in3, out3 = 256, 192
    k_params3, k_x3, key = jax.random.split(key, 3)
    params3 = init_ulinear_params(k_params3, in3, out3, mid_in, mid_out)
    x3 = jax.random.normal(k_x3, (batch, seq, in3), dtype=jnp.float32)

    w_t3, bias_vec3 = ulinear_prepare(*params3, block_k=128,
                                      compute_dtype=jnp.bfloat16)
    out3_v = jax.block_until_ready(
        ulinear_forward(x3, w_t3, bias_vec3, block_k=128,
                        force_reduction_grid=True))
    ref3 = ulinear_reference(x3, *params3)
    assert out3_v.shape == (batch, seq, out3)
    assert jnp.allclose(out3_v, ref3, atol=5e-2, rtol=5e-2), "mismatch vs reference (case 3)"

    print("KERNEL_OK")
</pallas_src>

<mosaic_0001>
module attributes {stable_mosaic.version = 11 : i64} {
  func.func @_matmul_bias_kernel_wres(%arg0: i32, %arg1: i32, %arg2: memref<8x128xf32, #tpu.memory_space<vmem>>, %arg3: memref<128x128xf32, #tpu.memory_space<vmem>>, %arg4: memref<1x128xf32, #tpu.memory_space<vmem>>, %arg5: memref<8x128xf32, #tpu.memory_space<vmem>>) attributes {dimension_semantics = [#tpu.dimension_semantics<parallel>, #tpu.dimension_semantics<parallel>], iteration_bounds = array<i64: 1, 2>, scalar_prefetch = 0 : i64, scratch_operands = 0 : i64, tpu.core_type = #tpu.core_type<tc>, window_params = [{transform_indices = @transform_0, window_bounds = array<i64: 8, 128>}, {transform_indices = @transform_1, window_bounds = array<i64: 128, 128>}, {transform_indices = @transform_2, window_bounds = array<i64: 1, 128>}, {transform_indices = @transform_3, window_bounds = array<i64: 8, 128>}]} {
    %c0 = arith.constant 0 : index
    %c0_0 = arith.constant 0 : index
    %0 = vector.load %arg2[%c0, %c0_0] : memref<8x128xf32, #tpu.memory_space<vmem>>, vector<8x128xf32>
    %c0_1 = arith.constant 0 : index
    %c0_2 = arith.constant 0 : index
    %1 = vector.load %arg3[%c0_1, %c0_2] : memref<128x128xf32, #tpu.memory_space<vmem>>, vector<128x128xf32>
    %cst = arith.constant dense<0.000000e+00> : vector<8x128xf32>
    %2 = tpu.matmul %0, %1, %cst {dimension_numbers = #tpu.dot_dimension_numbers<[1], [0], [0], [1], [0, 0, 1, 1], [], []>} : vector<8x128xf32>, vector<128x128xf32>, vector<8x128xf32> -> vector<8x128xf32>
    %c0_3 = arith.constant 0 : index
    %c0_4 = arith.constant 0 : index
    %3 = vector.load %arg4[%c0_3, %c0_4] : memref<1x128xf32, #tpu.memory_space<vmem>>, vector<1x128xf32>
    %4 = vector.broadcast %3 : vector<1x128xf32> to vector<8x128xf32>
    %5 = arith.addf %2, %4 : vector<8x128xf32>
    %c0_5 = arith.constant 0 : index
    %c0_6 = arith.constant 0 : index
    %6 = vector.load %arg5[%c0_5, %c0_6] : memref<8x128xf32, #tpu.memory_space<vmem>>, vector<8x128xf32>
    tpu.vector_store %arg5[%c0_5, %c0_6], %5 {strides = array<i32>} : memref<8x128xf32, #tpu.memory_space<vmem>>, vector<8x128xf32>,
    return
  }
  func.func @transform_0(%arg0: i32, %arg1: i32) -> (i32, i32) {
    %c0_i32 = arith.constant 0 : i32
    %c0_i32_0 = arith.constant 0 : i32
    return %arg1, %c0_i32 : i32, i32
  }
  func.func @transform_1(%arg0: i32, %arg1: i32) -> (i32, i32) {
    %c0_i32 = arith.constant 0 : i32
    %c0_i32_0 = arith.constant 0 : i32
    return %c0_i32, %arg0 : i32, i32
  }
  func.func @transform_2(%arg0: i32, %arg1: i32) -> (i32, i32) {
    %c0_i32 = arith.constant 0 : i32
    %c0_i32_0 = arith.constant 0 : i32
    return %c0_i32, %arg0 : i32, i32
  }
  func.func @transform_3(%arg0: i32, %arg1: i32) -> (i32, i32) {
    %c0_i32 = arith.constant 0 : i32
    return %arg1, %arg0 : i32, i32
  }
}

</mosaic_0001>

<llo_original>
// kernel: ulinear_forward.1
$region0: #{ulinear_forward.1}
  #allocation0 [shape = 'u32[]', space=smem, size = 0x4, offset = 0x4, fixed_abs, tag = 'smem constant byte address 0x4 - core index']
  #allocation1 [shape = 'u32[72,128]{1,0:T(1,128)}', space=vmem, size = 0x9000, scoped, tag = 'internal scratch']
  %s0 = inlined_call_operand.vmem [shape: f32[16,128], index: 0, kind: input, shape index: {}]
  %s1 = inlined_call_operand.hbm [shape: f32[128,128], index: 1, kind: input, shape index: {}]
  %s2 = inlined_call_operand.vmem [shape: f32[1,128], index: 2, kind: input, shape index: {}]
  %s3 = inlined_call_operand.vmem [shape: f32[16,128], index: 3, kind: output, shape index: {}]
  %s4 = sld [smem:[#allocation0]]
  $region49: #{ulinear_forward.1} parent=0
    _
  %s6 = ssub.s32 1, %s4
  %s7 = scalar_select 0, %s6, %s4
  $region1: #{ulinear_forward.1} parent=0
    #allocation2 [shape = 'u8[65536]{0}', space=vmem, size = 0x10000, scoped, tag = 'input window, operand 1, single buffered']
    #allocation3 [shape = 's32[2]{0}', space=sflag, size = 0x8, scoped, tag = 'scoped memory for ulinear_forward.1']
    %8 = vsyncpa [#allocation3], 0
    loop: start=0, step=1, limit=4
    $region2: #{ulinear_forward.1} parent=1 // loop_pre_header
      _
    $region3: #{ulinear_forward.1} parent=1 // loop_header
      %s10 = sphi 0, %s14
      %p11 = scmp.ge.s32.totalorder %s10, 4
      %s17 = sphi 0, %s29
      %s18 = sphi 0, %s25
      %s19 = sphi 0, %s17
      %s20 = sphi 0, %s18
      %s21 = sphi 0, %s19
      %s22 = sphi 0, %s20
      %s32 = sphi 0, %s34
      %s35 = sphi 0, %s32
      %s36 = sphi 0, %s35
      %s52 = sphi 0, %s36
      %s58 = sphi 0, %s60
      %s61 = sphi 0, %s58
      %s62 = sphi 0, %s61
      %s78 = sphi 0, %s62
      %s84 = sphi 0, %s86
      %s87 = sphi 0, %s84
      %s88 = sphi 0, %s87
      %s104 = sphi 0, %s88
      %s112 = sphi 0, %s114
      %s115 = sphi 0, %s112
      %s116 = sphi 0, %s115
      %s132 = sphi 0, %s116
    $region4: #{ulinear_forward.1} parent=1 // loop_header_branch
      %13 = sbr.rel (%p11) target = $region8
    $region5: #{ulinear_forward.1} parent=1 // loop_body
      %s15 = ssub.s32 %s10, 1
      %s16 = ssub.s32 %s10, 2
      %s23 = sadd.s32 1, %s18
      %p24 = scmp.ge.s32.totalorder %s23, 2
      %s25 = scalar_select %p24, 0, %s23
      %s26 = sadd.s32 1, %s17
      %s27 = scalar_select %p24, %s26, %s17
      %p28 = scmp.ge.s32.totalorder %s27, 1
      %s29 = scalar_select %p28, 0, %s27
      %s30 = ssub.s32 %s18, %s25
      %p31 = scmp.eq.s32.totalorder %s30, 0
      %s33 = sadd.s32 %s32, 1
      %s34 = scalar_select %p31, %s32, %s33
      %p37 = pneg %p31
      %p38 = scmp.eq.s32.totalorder %s10, 1
      %p39 = por %p37, %p38
      %p40 = scmp.ne.s32.totalorder %s32, %s35
      %p41 = scmp.eq.s32.totalorder %s10, 0
      %p42 = por %p40, %p41
      %p43 = scmp.ne.s32.totalorder %s32, %s35
      %p44 = scmp.eq.s32.totalorder %s15, 1
      %p45 = por %p43, %p44
      %p46 = scmp.ne.s32.totalorder %s35, %s36
      %p47 = scmp.eq.s32.totalorder %s15, 0
      %p48 = por %p46, %p47
      %p49 = scmp.ne.s32.totalorder %s35, %s36
      %p50 = scmp.eq.s32.totalorder %s16, 1
      %p51 = por %p49, %p50
      %p53 = scmp.ne.s32.totalorder %s36, %s52
      %p54 = scmp.eq.s32.totalorder %s16, 0
      %p55 = por %p53, %p54
      %s56 = ssub.s32 %s17, %s29
      %p57 = scmp.eq.s32.totalorder %s56, 0
      %s59 = sadd.s32 %s58, 1
      %s60 = scalar_select %p57, %s58, %s59
      %p63 = pneg %p57
      %p64 = scmp.eq.s32.totalorder %s10, 1
      %p65 = por %p63, %p64
      %p66 = scmp.ne.s32.totalorder %s58, %s61
      %p67 = scmp.eq.s32.totalorder %s10, 0
      %p68 = por %p66, %p67
      %p69 = scmp.ne.s32.totalorder %s58, %s61
      %p70 = scmp.eq.s32.totalorder %s15, 1
      %p71 = por %p69, %p70
      %p72 = scmp.ne.s32.totalorder %s61, %s62
      %p73 = scmp.eq.s32.totalorder %s15, 0
      %p74 = por %p72, %p73
      %p75 = scmp.ne.s32.totalorder %s61, %s62
      %p76 = scmp.eq.s32.totalorder %s16, 1
      %p77 = por %p75, %p76
      %p79 = scmp.ne.s32.totalorder %s62, %s78
      %p80 = scmp.eq.s32.totalorder %s16, 0
      %p81 = por %p79, %p80
      %s82 = ssub.s32 %s17, %s29
      %p83 = scmp.eq.s32.totalorder %s82, 0
      %s85 = sadd.s32 %s84, 1
      %s86 = scalar_select %p83, %s84, %s85
      %p89 = pneg %p83
      %p90 = scmp.eq.s32.totalorder %s10, 1
      %p91 = por %p89, %p90
      %p92 = scmp.ne.s32.totalorder %s84, %s87
      %p93 = scmp.eq.s32.totalorder %s10, 0
      %p94 = por %p92, %p93
      %p95 = scmp.ne.s32.totalorder %s84, %s87
      %p96 = scmp.eq.s32.totalorder %s15, 1
      %p97 = por %p95, %p96
      %p98 = scmp.ne.s32.totalorder %s87, %s88
      %p99 = scmp.eq.s32.totalorder %s15, 0
      %p100 = por %p98, %p99
      %p101 = scmp.ne.s32.totalorder %s87, %s88
      %p102 = scmp.eq.s32.totalorder %s16, 1
      %p103 = por %p101, %p102
      %p105 = scmp.ne.s32.totalorder %s88, %s104
      %p106 = scmp.eq.s32.totalorder %s16, 0
      %p107 = por %p105, %p106
      %s108 = ssub.s32 %s18, %s25
      %s109 = ssub.s32 %s17, %s29
      %s110 = sor.u32 %s108, %s109
      %p111 = scmp.eq.s32.totalorder %s110, 0
      %s113 = sadd.s32 %s112, 1
      %s114 = scalar_select %p111, %s112, %s113
      %p117 = pneg %p111
      %p118 = scmp.eq.s32.totalorder %s10, 1
      %p119 = por %p117, %p118
      %p120 = scmp.ne.s32.totalorder %s112, %s115
      %p121 = scmp.eq.s32.totalorder %s10, 0
      %p122 = por %p120, %p121
      %p123 = scmp.ne.s32.totalorder %s112, %s115
      %p124 = scmp.eq.s32.totalorder %s15, 1
      %p125 = por %p123, %p124
      %p126 = scmp.ne.s32.totalorder %s115, %s116
      %p127 = scmp.eq.s32.totalorder %s15, 0
      %p128 = por %p126, %p127
      %p129 = scmp.ne.s32.totalorder %s115, %s116
      %p130 = scmp.eq.s32.totalorder %s16, 1
      %p131 = por %p129, %p130
      %p133 = scmp.ne.s32.totalorder %s116, %s132
      %p134 = scmp.eq.s32.totalorder %s16, 0
      %p135 = por %p133, %p134
      %p136 = scmp.le.s32.totalorder 1, %s10
      %p137 = scmp.lt.s32.totalorder %s10, 3
      %p138 = pnand %p136, %p137
      %p139 = pneg %p138
      // Predicated region
      $region9: #{ulinear_forward.1} parent=5 // pred_check
        _
      $region10: #{ulinear_forward.1} parent=5 // pred_check_branch
        %141 = sbr.rel (%p138) target = $region12
      $region11: #{ulinear_forward.1} parent=5 // pred_region
        %s142 = ssub.s32 %s10, 1
        // Predicated region
        $region13: #{ulinear_forward.1} parent=11 // pred_check
          %p143 = pneg %p74
        $region14: #{ulinear_forward.1} parent=11 // pred_check_branch
          %145 = sbr.rel (%p143) target = $region16
        $region15: #{ulinear_forward.1} parent=11 // pred_region
          %147 = vsyncadd [#allocation3], 0
          %s148 = smul.addr %s19, 8
          %s149 = scalar_lea.hbm %s1, %s148
          %s150 = sshll.u32 %s149, 4
          %s151 = int_to_ptr.hbm [resolvable:$true] %s150
          %s152 = sshll.u32 [#allocation2], 4
          %s153 = int_to_ptr.vmem [resolvable:$true] %s152
          %158 = dma.hbm_to_vmem [thread:$0]  %s151, 2048, %s153, [#allocation3], 128, 128, 8
        $region16: #{ulinear_forward.1} parent=11 // pred_fallthru
          _
        // Predicated region
        $region17: #{ulinear_forward.1} parent=11 // pred_check
          %p159 = pneg %p100
        $region18: #{ulinear_forward.1} parent=11 // pred_check_branch
          %161 = sbr.rel (%p159) target = $region20
        $region19: #{ulinear_forward.1} parent=11 // pred_region
          %p162 = scmp.lt.s32.totalorder %s19, 0
          %s163 = scalar_select %p162, %s19, 0
          %s164 = scalar_lea.vmem %s2, %s163
        $region20: #{ulinear_forward.1} parent=11 // pred_fallthru
          _
      $region12: #{ulinear_forward.1} parent=5 // pred_fallthru
        _
      %p165 = scmp.lt.s32.totalorder %s10, 2
      // Predicated region
      $region21: #{ulinear_forward.1} parent=5 // pred_check
        %p166 = pneg %p165
      $region22: #{ulinear_forward.1} parent=5 // pred_check_branch
        %168 = sbr.rel (%p166) target = $region24
      $region23: #{ulinear_forward.1} parent=5 // pred_region
        // Predicated region
        $region25: #{ulinear_forward.1} parent=23 // pred_check
          %p169 = pneg %p42
        $region26: #{ulinear_forward.1} parent=23 // pred_check_branch
          %171 = sbr.rel (%p169) target = $region28
        $region27: #{ulinear_forward.1} parent=23 // pred_region
          %p172 = scmp.lt.s32.totalorder %s18, 1
          %s173 = scalar_select %p172, %s18, 1
          %s174 = smul.addr %s173, 8
          %s175 = scalar_lea.vmem %s0, %s174
        $region28: #{ulinear_forward.1} parent=23 // pred_fallthru
          _
      $region24: #{ulinear_forward.1} parent=5 // pred_fallthru
        _
      %p176 = scmp.le.s32.totalorder 1, %s10
      %p177 = scmp.lt.s32.totalorder %s10, 3
      %p178 = pnand %p176, %p177
      %p179 = pneg %p178
      // Predicated region
      $region29: #{ulinear_forward.1} parent=5 // pred_check
        _
      $region30: #{ulinear_forward.1} parent=5 // pred_check_branch
        %181 = sbr.rel (%p178) target = $region32
      $region31: #{ulinear_forward.1} parent=5 // pred_region
        %s182 = ssub.s32 %s10, 1
        // Predicated region
        $region33: #{ulinear_forward.1} parent=31 // pred_check
          %p183 = pneg %p74
        $region34: #{ulinear_forward.1} parent=31 // pred_check_branch
          %185 = sbr.rel (%p183) target = $region36
        $region35: #{ulinear_forward.1} parent=31 // pred_region
          %187 = dma.done [#allocation3], 2048
        $region36: #{ulinear_forward.1} parent=31 // pred_fallthru
          _
        %p188 = scmp.lt.s32.totalorder %s20, 1
        %s189 = scalar_select %p188, %s20, 1
        %s190 = smul.addr %s189, 8
        %s191 = scalar_lea.vmem %s0, %s190
        %p192 = pneg %p48
        %p193 = pneg %p45
        %p194 = pneg %p74
        %p195 = pneg %p71
        %p196 = scmp.lt.s32.totalorder %s19, 0
        %s197 = scalar_select %p196, %s19, 0
        %s198 = scalar_lea.vmem %s2, %s197
        %p199 = pneg %p100
        %p200 = pneg %p97
        %p201 = pneg %p128
        %p202 = pneg %p125
        %p203 = scmp.lt.s32.totalorder %s20, 1
        %s204 = scalar_select %p203, %s20, 1
        %p205 = scmp.lt.s32.totalorder %s19, 0
        %s206 = scalar_select %p205, %s19, 0
        %s207 = sadd.s32 %s206, %s204
        %s208 = smul.addr %s207, 8
        %s209 = scalar_lea.vmem %s3, %s208
        %p210 = scmp.lt.s32.totalorder %s20, 1
        %s211 = scalar_select %p210, %s20, 1
        %s212 = smul.addr %s211, 8
        %s213 = scalar_lea.vmem %s0, %s212
        %p214 = scmp.lt.s32.totalorder %s19, 0
        %s215 = scalar_select %p214, %s19, 0
        %s216 = scalar_lea.vmem %s2, %s215
        %p217 = scmp.lt.s32.totalorder %s20, 1
        %s218 = scalar_select %p217, %s20, 1
        %p219 = scmp.lt.s32.totalorder %s19, 0
        %s220 = scalar_select %p219, %s19, 0
        %s221 = sadd.s32 %s220, %s218
        %s222 = smul.addr %s221, 8
        %s223 = scalar_lea.vmem %s3, %s222
        %v224 = vld [vmem:[%s213] sm:$0xff]
        %v225 = vld [vmem:[#allocation2] sm:$0xff]
        %v226 = vld [vmem:[#allocation2 + $0x8] sm:$0xff]
        %v227 = vld [vmem:[#allocation2 + $0x10] sm:$0xff]
        %v228 = vld [vmem:[#allocation2 + $0x18] sm:$0xff]
        %v229 = vld [vmem:[#allocation2 + $0x20] sm:$0xff]
        %v230 = vld [vmem:[#allocation2 + $0x28] sm:$0xff]
        %v231 = vld [vmem:[#allocation2 + $0x30] sm:$0xff]
        %v232 = vld [vmem:[#allocation2 + $0x38] sm:$0xff]
        %v233 = vld [vmem:[#allocation2 + $0x40] sm:$0xff]
        %v234 = vld [vmem:[#allocation2 + $0x48] sm:$0xff]
        %v235 = vld [vmem:[#allocation2 + $0x50] sm:$0xff]
        %v236 = vld [vmem:[#allocation2 + $0x58] sm:$0xff]
        %v237 = vld [vmem:[#allocation2 + $0x60] sm:$0xff]
        %v238 = vld [vmem:[#allocation2 + $0x68] sm:$0xff]
        %v239 = vld [vmem:[#allocation2 + $0x70] sm:$0xff]
        %v240 = vld [vmem:[#allocation2 + $0x78] sm:$0xff]
        %v241 = vld [vmem:[%s216] sm:$0x1]
        %v243 = vperm.slane %v241, 0
        %245 = vmatpush.msra.mxu0 %v240
        %246 = vmatpush.msra.mxu0 %v239
        %247 = vmatpush.msra.mxu0 %v238
        %248 = vmatpush.msra.mxu0 %v237
        %249 = vmatpush.msra.mxu0 %v236
        %250 = vmatpush.msra.mxu0 %v235
        %251 = vmatpush.msra.mxu0 %v234
        %252 = vmatpush.msra.mxu0 %v233
        %253 = vmatpush.msra.mxu0 %v232
        %254 = vmatpush.msra.mxu0 %v231
        %255 = vmatpush.msra.mxu0 %v230
        %256 = vmatpush.msra.mxu0 %v229
        %257 = vmatpush.msra.mxu0 %v228
        %258 = vmatpush.msra.mxu0 %v227
        %259 = vmatpush.msra.mxu0 %v226
        %260 = vmatpush.msra.mxu0 %v225
        %261 = vmatmul.f32.gmra.mxu0 %v224
        %v262 = vpop.f32.mrf.mxu0
        %v263 = vadd.f32 %v243, %v262
        %264 = vdwg.mxu0
        %265 = vst [vmem:[%s223] sm:$0xff] %v263
        %p266 = scmp.lt.s32.totalorder %s20, 1
        %s267 = scalar_select %p266, %s20, 1
        %p268 = scmp.lt.s32.totalorder %s19, 0
        %s269 = scalar_select %p268, %s19, 0
        %s270 = sadd.s32 %s269, %s267
        %s271 = smul.addr %s270, 8
        %s272 = scalar_lea.vmem %s3, %s271
        // Predicated region
        $region37: #{ulinear_forward.1} parent=31 // pred_check
          %p273 = pneg %p125
        $region38: #{ulinear_forward.1} parent=31 // pred_check_branch
          %275 = sbr.rel (%p273) target = $region40
        $region39: #{ulinear_forward.1} parent=31 // pred_region
          _
        $region40: #{ulinear_forward.1} parent=31 // pred_fallthru
          _
      $region32: #{ulinear_forward.1} parent=5 // pred_fallthru
        _
      %p276 = scmp.le.s32.totalorder 2, %s10
      // Predicated region
      $region41: #{ulinear_forward.1} parent=5 // pred_check
        %p277 = pneg %p276
      $region42: #{ulinear_forward.1} parent=5 // pred_check_branch
        %279 = sbr.rel (%p277) target = $region44
      $region43: #{ulinear_forward.1} parent=5 // pred_region
        %s280 = ssub.s32 %s10, 2
        // Predicated region
        $region45: #{ulinear_forward.1} parent=43 // pred_check
          %p281 = pneg %p131
        $region46: #{ulinear_forward.1} parent=43 // pred_check_branch
          %283 = sbr.rel (%p281) target = $region48
        $region47: #{ulinear_forward.1} parent=43 // pred_region
          %p284 = scmp.lt.s32.totalorder %s22, 1
          %s285 = scalar_select %p284, %s22, 1
          %p286 = scmp.lt.s32.totalorder %s21, 0
          %s287 = scalar_select %p286, %s21, 0
          %s288 = sadd.s32 %s287, %s285
          %s289 = smul.addr %s288, 8
          %s290 = scalar_lea.vmem %s3, %s289
        $region48: #{ulinear_forward.1} parent=43 // pred_fallthru
          _
      $region44: #{ulinear_forward.1} parent=5 // pred_fallthru
        _
    $region6: #{ulinear_forward.1} parent=1 // loop_footer
      %s14 = sadd.s32 1, %s10
    $region7: #{ulinear_forward.1} parent=1 // loop_footer_branch
      %9 = sbr.rel target = $region3
    $region8: #{ulinear_forward.1} parent=1 // loop_exit
      _
    %291 = vsyncpa [#allocation3], 1
    %s292 = scalar_lea.sflag [#allocation3], 1
    %293 = vsyncpa %s292, 1

</llo_original>
